<compile_context>
chip_gen: v7x
topology: tpu7x:2x2x1
jax: 0.10.0
libtpu: 0.0.40
codegen_flags: <defaults>
</compile_context>

<pallas_src>
import functools

import jax
import jax.numpy as jnp
import numpy as np
from jax.experimental import pallas as pl
from jax.experimental.pallas import tpu as pltpu


def _conv_kernel(x_ref, w_ref, b_ref, o_ref, p_scr, *,
                 N, C, W, KH, KW, MP, KKC, KKC_PAD):
    """Fused im2col + single-pass conv-as-matmul.

    x_ref : (N, C, WPAD)     f32  flattened (H*W) input rows, zero-padded lanes
    w_ref : (OC, KKC_PAD)    mxu dtype, OIHW->(OC,(kh,kw,c)) flatten, K zero-padded
    b_ref : (OC, 1)          f32  bias (epilogue stays f32 on all generations)
    o_ref : (N, OC, MP)      f32  per-anchor output, MP = H*W (lane-dense)
    p_scr : (KKC_PAD, N*MP)  f32  VMEM scratch holding the fused im2col taps
    """
    # Zero only the K-padding rows so they contribute exactly 0 to the dot.
    if KKC_PAD > KKC:
        p_scr[pl.ds(KKC, KKC_PAD - KKC), :] = jnp.zeros(
            (KKC_PAD - KKC, N * MP), p_scr.dtype)

    # Fused im2col: the tap for (kh, kw) is the flat input row shifted by
    # kh*W + kw -> a static lane-offset slice of x_ref.  Anchors whose window
    # would wrap a row yield wrong-but-finite values (the padded tail is
    # zero); the wrapper slices them off.
    for kh in range(KH):
        for kw in range(KW):
            shift = kh * W + kw
            row0 = (kh * KW + kw) * C
            for n in range(N):
                p_scr[pl.ds(row0, C), pl.ds(n * MP, MP)] = \
                    x_ref[n, :, pl.ds(shift, MP)]

    # One MXU pass: (OC, KKC_PAD) @ (KKC_PAD, N*MP), f32 accumulation.
    acc = jnp.dot(w_ref[...], p_scr[...].astype(w_ref.dtype),
                  preferred_element_type=jnp.float32)
    acc = acc + b_ref[...]                       # f32 bias epilogue (VPU)
    for n in range(N):                           # lane-dense (OC, MP) stores
        o_ref[n] = acc[:, n * MP:(n + 1) * MP].astype(o_ref.dtype)


def conv2d_pallas(x_nchw, w_oihw, bias, *, mxu_dtype=jnp.float32):
    """Conv2d, stride=1, padding=0 (VALID). Returns NCHW output in f32.

    mxu_dtype=f32 (default) matches PyTorch's f32 Conv2d; bf16 hits the native
    bf16 MXU datapath on v5e/v6e/v7x with f32 accumulation + f32 bias.
    """
    N, C, H, W = x_nchw.shape
    OC, C_w, KH, KW = w_oihw.shape
    assert C == C_w
    OH, OW = H - KH + 1, W - KW + 1
    HW = H * W                                   # anchors computed per image
    MP = HW                                      # 256 -> lane-dense output
    KKC = KH * KW * C                            # 27
    KKC_PAD = -(-KKC // 8) * 8                   # 27 -> 32
    max_shift = (KH - 1) * W + (KW - 1)          # 34
    WPAD = -(-(HW + max_shift) // 128) * 128     # 290 -> 384 (lane aligned)

    # Tiny wrapper glue (~1x HBM traffic): flatten + lane-pad the 6 KB input,
    # flatten + K-pad the weights.  No im2col slab, no output transpose.
    x_flat = jnp.pad(x_nchw.astype(jnp.float32).reshape(N, C, HW),
                     ((0, 0), (0, 0), (0, WPAD - HW)))
    w_flat = jnp.transpose(w_oihw, (0, 2, 3, 1)).reshape(OC, KKC)
    w_pad = jnp.pad(w_flat, ((0, 0), (0, KKC_PAD - KKC))).astype(mxu_dtype)
    b_col = bias.reshape(OC, 1).astype(jnp.float32)

    kernel = functools.partial(_conv_kernel, N=N, C=C, W=W, KH=KH, KW=KW,
                               MP=MP, KKC=KKC, KKC_PAD=KKC_PAD)

    # No grid: every operand is a single full-array VMEM block (~80 KB total),
    # so there is no pipeline-step overhead at all at this size.
    out_full = pl.pallas_call(
        kernel,
        out_shape=jax.ShapeDtypeStruct((N, OC, MP), jnp.float32),
        in_specs=[pl.BlockSpec(memory_space=pltpu.MemorySpace.VMEM)] * 3,
        out_specs=pl.BlockSpec(memory_space=pltpu.MemorySpace.VMEM),
        scratch_shapes=[pltpu.VMEM((KKC_PAD, N * MP), jnp.float32)],
    )(x_flat, w_pad, b_col)

    # (N, OC, H*W) -> (N, OC, H, W) -> keep valid anchors -> NCHW (N, OC, OH, OW)
    return out_full.reshape(N, OC, H, W)[:, :, :OH, :OW]


if __name__ == "__main__":
    key = jax.random.PRNGKey(0)
    kx, kw_, kb = jax.random.split(key, 3)

    # NCHW input consistent with Conv2d(3 -> 6, k=3): (N=2, C=3, H=16, W=16)
    x = jax.random.normal(kx, (2, 3, 16, 16), dtype=jnp.float32)

    # Deterministic PyTorch-style init (uniform bound 1/sqrt(fan_in))
    fan_in = 3 * 3 * 3
    bound = 1.0 / np.sqrt(fan_in)
    w = jax.random.uniform(kw_, (6, 3, 3, 3), jnp.float32, -bound, bound)
    b = jax.random.uniform(kb, (6,), jnp.float32, -bound, bound)

    out = jax.block_until_ready(conv2d_pallas(x, w, b))

    # Reference: XLA conv + bias
    ref = jax.lax.conv_general_dilated(
        x, w, window_strides=(1, 1), padding="VALID",
        dimension_numbers=("NCHW", "OIHW", "NCHW"),
    ) + b.reshape(1, 6, 1, 1)

    assert out.shape == (2, 6, 14, 14), out.shape
    np.testing.assert_allclose(np.asarray(out), np.asarray(ref),
                               rtol=1e-5, atol=1e-5)

    # bf16-MXU path (valid on v5e/v6e/v7x): bf16 matmul operands,
    # f32 accumulation + f32 bias epilogue.
    out_bf16 = jax.block_until_ready(
        conv2d_pallas(x, w, b, mxu_dtype=jnp.bfloat16))
    np.testing.assert_allclose(np.asarray(out_bf16), np.asarray(ref),
                               rtol=5e-2, atol=5e-2)

    print("KERNEL_OK")
</pallas_src>

<mosaic_0001>
module attributes {stable_mosaic.version = 11 : i64} {
  func.func @_conv_kernel(%arg0: memref<2x3x384xf32, #tpu.memory_space<vmem>>, %arg1: memref<6x32xf32, #tpu.memory_space<vmem>>, %arg2: memref<6x1xf32, #tpu.memory_space<vmem>>, %arg3: memref<2x6x256xf32, #tpu.memory_space<vmem>>, %arg4: memref<32x512xf32, #tpu.memory_space<vmem>>) attributes {dimension_semantics = [], scalar_prefetch = 0 : i64, scratch_operands = 1 : i64, tpu.core_type = #tpu.core_type<tc>} {
    %cst = arith.constant 0.000000e+00 : f32
    %0 = vector.broadcast %cst : f32 to vector<5x512xf32>
    %c27 = arith.constant 27 : index
    %c0 = arith.constant 0 : index
    %1 = vector.load %arg4[%c27, %c0] : memref<32x512xf32, #tpu.memory_space<vmem>>, vector<5x512xf32>
    tpu.vector_store %arg4[%c27, %c0], %0 {strides = array<i32>} : memref<32x512xf32, #tpu.memory_space<vmem>>, vector<5x512xf32>,
    %c0_0 = arith.constant 0 : index
    %c0_1 = arith.constant 0 : index
    %c0_2 = arith.constant 0 : index
    %2 = vector.load %arg0[%c0_0, %c0_1, %c0_2] : memref<2x3x384xf32, #tpu.memory_space<vmem>>, vector<1x3x256xf32>
    %3 = vector.shape_cast %2 : vector<1x3x256xf32> to vector<3x256xf32>
    %c0_3 = arith.constant 0 : index
    %c0_4 = arith.constant 0 : index
    %4 = vector.load %arg4[%c0_3, %c0_4] : memref<32x512xf32, #tpu.memory_space<vmem>>, vector<3x256xf32>
    tpu.vector_store %arg4[%c0_3, %c0_4], %3 {strides = array<i32>} : memref<32x512xf32, #tpu.memory_space<vmem>>, vector<3x256xf32>,
    %c1 = arith.constant 1 : index
    %c0_5 = arith.constant 0 : index
    %c0_6 = arith.constant 0 : index
    %5 = vector.load %arg0[%c1, %c0_5, %c0_6] : memref<2x3x384xf32, #tpu.memory_space<vmem>>, vector<1x3x256xf32>
    %6 = vector.shape_cast %5 : vector<1x3x256xf32> to vector<3x256xf32>
    %c0_7 = arith.constant 0 : index
    %c256 = arith.constant 256 : index
    %7 = vector.load %arg4[%c0_7, %c256] : memref<32x512xf32, #tpu.memory_space<vmem>>, vector<3x256xf32>
    tpu.vector_store %arg4[%c0_7, %c256], %6 {strides = array<i32>} : memref<32x512xf32, #tpu.memory_space<vmem>>, vector<3x256xf32>,
    %c0_8 = arith.constant 0 : index
    %c0_9 = arith.constant 0 : index
    %c1_10 = arith.constant 1 : index
    %8 = vector.load %arg0[%c0_8, %c0_9, %c1_10] : memref<2x3x384xf32, #tpu.memory_space<vmem>>, vector<1x3x256xf32>
    %9 = vector.shape_cast %8 : vector<1x3x256xf32> to vector<3x256xf32>
    %c3 = arith.constant 3 : index
    %c0_11 = arith.constant 0 : index
    %10 = vector.load %arg4[%c3, %c0_11] : memref<32x512xf32, #tpu.memory_space<vmem>>, vector<3x256xf32>
    tpu.vector_store %arg4[%c3, %c0_11], %9 {strides = array<i32>} : memref<32x512xf32, #tpu.memory_space<vmem>>, vector<3x256xf32>,
    %c1_12 = arith.constant 1 : index
    %c0_13 = arith.constant 0 : index
    %c1_14 = arith.constant 1 : index
    %11 = vector.load %arg0[%c1_12, %c0_13, %c1_14] : memref<2x3x384xf32, #tpu.memory_space<vmem>>, vector<1x3x256xf32>
    %12 = vector.shape_cast %11 : vector<1x3x256xf32> to vector<3x256xf32>
    %c3_15 = arith.constant 3 : index
    %c256_16 = arith.constant 256 : index
    %13 = vector.load %arg4[%c3_15, %c256_16] : memref<32x512xf32, #tpu.memory_space<vmem>>, vector<3x256xf32>
    tpu.vector_store %arg4[%c3_15, %c256_16], %12 {strides = array<i32>} : memref<32x512xf32, #tpu.memory_space<vmem>>, vector<3x256xf32>,
    %c0_17 = arith.constant 0 : index
    %c0_18 = arith.constant 0 : index
    %c2 = arith.constant 2 : index
    %14 = vector.load %arg0[%c0_17, %c0_18, %c2] : memref<2x3x384xf32, #tpu.memory_space<vmem>>, vector<1x3x256xf32>
    %15 = vector.shape_cast %14 : vector<1x3x256xf32> to vector<3x256xf32>
    %c6 = arith.constant 6 : index
    %c0_19 = arith.constant 0 : index
    %16 = vector.load %arg4[%c6, %c0_19] : memref<32x512xf32, #tpu.memory_space<vmem>>, vector<3x256xf32>
    tpu.vector_store %arg4[%c6, %c0_19], %15 {strides = array<i32>} : memref<32x512xf32, #tpu.memory_space<vmem>>, vector<3x256xf32>,
    %c1_20 = arith.constant 1 : index
    %c0_21 = arith.constant 0 : index
    %c2_22 = arith.constant 2 : index
    %17 = vector.load %arg0[%c1_20, %c0_21, %c2_22] : memref<2x3x384xf32, #tpu.memory_space<vmem>>, vector<1x3x256xf32>
    %18 = vector.shape_cast %17 : vector<1x3x256xf32> to vector<3x256xf32>
    %c6_23 = arith.constant 6 : index
    %c256_24 = arith.constant 256 : index
    %19 = vector.load %arg4[%c6_23, %c256_24] : memref<32x512xf32, #tpu.memory_space<vmem>>, vector<3x256xf32>
    tpu.vector_store %arg4[%c6_23, %c256_24], %18 {strides = array<i32>} : memref<32x512xf32, #tpu.memory_space<vmem>>, vector<3x256xf32>,
    %c0_25 = arith.constant 0 : index
    %c0_26 = arith.constant 0 : index
    %c16 = arith.constant 16 : index
    %20 = vector.load %arg0[%c0_25, %c0_26, %c16] : memref<2x3x384xf32, #tpu.memory_space<vmem>>, vector<1x3x256xf32>
    %21 = vector.shape_cast %20 : vector<1x3x256xf32> to vector<3x256xf32>
    %c9 = arith.constant 9 : index
    %c0_27 = arith.constant 0 : index
    %22 = vector.load %arg4[%c9, %c0_27] : memref<32x512xf32, #tpu.memory_space<vmem>>, vector<3x256xf32>
    tpu.vector_store %arg4[%c9, %c0_27], %21 {strides = array<i32>} : memref<32x512xf32, #tpu.memory_space<vmem>>, vector<3x256xf32>,
    %c1_28 = arith.constant 1 : index
    %c0_29 = arith.constant 0 : index
    %c16_30 = arith.constant 16 : index
    %23 = vector.load %arg0[%c1_28, %c0_29, %c16_30] : memref<2x3x384xf32, #tpu.memory_space<vmem>>, vector<1x3x256xf32>
    %24 = vector.shape_cast %23 : vector<1x3x256xf32> to vector<3x256xf32>
    %c9_31 = arith.constant 9 : index
    %c256_32 = arith.constant 256 : index
    %25 = vector.load %arg4[%c9_31, %c256_32] : memref<32x512xf32, #tpu.memory_space<vmem>>, vector<3x256xf32>
    tpu.vector_store %arg4[%c9_31, %c256_32], %24 {strides = array<i32>} : memref<32x512xf32, #tpu.memory_space<vmem>>, vector<3x256xf32>,
    %c0_33 = arith.constant 0 : index
    %c0_34 = arith.constant 0 : index
    %c17 = arith.constant 17 : index
    %26 = vector.load %arg0[%c0_33, %c0_34, %c17] : memref<2x3x384xf32, #tpu.memory_space<vmem>>, vector<1x3x256xf32>
    %27 = vector.shape_cast %26 : vector<1x3x256xf32> to vector<3x256xf32>
    %c12 = arith.constant 12 : index
    %c0_35 = arith.constant 0 : index
    %28 = vector.load %arg4[%c12, %c0_35] : memref<32x512xf32, #tpu.memory_space<vmem>>, vector<3x256xf32>
    tpu.vector_store %arg4[%c12, %c0_35], %27 {strides = array<i32>} : memref<32x512xf32, #tpu.memory_space<vmem>>, vector<3x256xf32>,
    %c1_36 = arith.constant 1 : index
    %c0_37 = arith.constant 0 : index
    %c17_38 = arith.constant 17 : index
    %29 = vector.load %arg0[%c1_36, %c0_37, %c17_38] : memref<2x3x384xf32, #tpu.memory_space<vmem>>, vector<1x3x256xf32>
    %30 = vector.shape_cast %29 : vector<1x3x256xf32> to vector<3x256xf32>
    %c12_39 = arith.constant 12 : index
    %c256_40 = arith.constant 256 : index
    %31 = vector.load %arg4[%c12_39, %c256_40] : memref<32x512xf32, #tpu.memory_space<vmem>>, vector<3x256xf32>
    tpu.vector_store %arg4[%c12_39, %c256_40], %30 {strides = array<i32>} : memref<32x512xf32, #tpu.memory_space<vmem>>, vector<3x256xf32>,
    %c0_41 = arith.constant 0 : index
    %c0_42 = arith.constant 0 : index
    %c18 = arith.constant 18 : index
    %32 = vector.load %arg0[%c0_41, %c0_42, %c18] : memref<2x3x384xf32, #tpu.memory_space<vmem>>, vector<1x3x256xf32>
    %33 = vector.shape_cast %32 : vector<1x3x256xf32> to vector<3x256xf32>
    %c15 = arith.constant 15 : index
    %c0_43 = arith.constant 0 : index
    %34 = vector.load %arg4[%c15, %c0_43] : memref<32x512xf32, #tpu.memory_space<vmem>>, vector<3x256xf32>
    tpu.vector_store %arg4[%c15, %c0_43], %33 {strides = array<i32>} : memref<32x512xf32, #tpu.memory_space<vmem>>, vector<3x256xf32>,
    %c1_44 = arith.constant 1 : index
    %c0_45 = arith.constant 0 : index
    %c18_46 = arith.constant 18 : index
    %35 = vector.load %arg0[%c1_44, %c0_45, %c18_46] : memref<2x3x384xf32, #tpu.memory_space<vmem>>, vector<1x3x256xf32>
    %36 = vector.shape_cast %35 : vector<1x3x256xf32> to vector<3x256xf32>
    %c15_47 = arith.constant 15 : index
    %c256_48 = arith.constant 256 : index
    %37 = vector.load %arg4[%c15_47, %c256_48] : memref<32x512xf32, #tpu.memory_space<vmem>>, vector<3x256xf32>
    tpu.vector_store %arg4[%c15_47, %c256_48], %36 {strides = array<i32>} : memref<32x512xf32, #tpu.memory_space<vmem>>, vector<3x256xf32>,
    %c0_49 = arith.constant 0 : index
    %c0_50 = arith.constant 0 : index
    %c32 = arith.constant 32 : index
    %38 = vector.load %arg0[%c0_49, %c0_50, %c32] : memref<2x3x384xf32, #tpu.memory_space<vmem>>, vector<1x3x256xf32>
    %39 = vector.shape_cast %38 : vector<1x3x256xf32> to vector<3x256xf32>
    %c18_51 = arith.constant 18 : index
    %c0_52 = arith.constant 0 : index
    %40 = vector.load %arg4[%c18_51, %c0_52] : memref<32x512xf32, #tpu.memory_space<vmem>>, vector<3x256xf32>
    tpu.vector_store %arg4[%c18_51, %c0_52], %39 {strides = array<i32>} : memref<32x512xf32, #tpu.memory_space<vmem>>, vector<3x256xf32>,
    %c1_53 = arith.constant 1 : index
    %c0_54 = arith.constant 0 : index
    %c32_55 = arith.constant 32 : index
    %41 = vector.load %arg0[%c1_53, %c0_54, %c32_55] : memref<2x3x384xf32, #tpu.memory_space<vmem>>, vector<1x3x256xf32>
    %42 = vector.shape_cast %41 : vector<1x3x256xf32> to vector<3x256xf32>
    %c18_56 = arith.constant 18 : index
    %c256_57 = arith.constant 256 : index
    %43 = vector.load %arg4[%c18_56, %c256_57] : memref<32x512xf32, #tpu.memory_space<vmem>>, vector<3x256xf32>
    tpu.vector_store %arg4[%c18_56, %c256_57], %42 {strides = array<i32>} : memref<32x512xf32, #tpu.memory_space<vmem>>, vector<3x256xf32>,
    %c0_58 = arith.constant 0 : index
    %c0_59 = arith.constant 0 : index
    %c33 = arith.constant 33 : index
    %44 = vector.load %arg0[%c0_58, %c0_59, %c33] : memref<2x3x384xf32, #tpu.memory_space<vmem>>, vector<1x3x256xf32>
    %45 = vector.shape_cast %44 : vector<1x3x256xf32> to vector<3x256xf32>
    %c21 = arith.constant 21 : index
    %c0_60 = arith.constant 0 : index
    %46 = vector.load %arg4[%c21, %c0_60] : memref<32x512xf32, #tpu.memory_space<vmem>>, vector<3x256xf32>
    tpu.vector_store %arg4[%c21, %c0_60], %45 {strides = array<i32>} : memref<32x512xf32, #tpu.memory_space<vmem>>, vector<3x256xf32>,
    %c1_61 = arith.constant 1 : index
    %c0_62 = arith.constant 0 : index
    %c33_63 = arith.constant 33 : index
    %47 = vector.load %arg0[%c1_61, %c0_62, %c33_63] : memref<2x3x384xf32, #tpu.memory_space<vmem>>, vector<1x3x256xf32>
    %48 = vector.shape_cast %47 : vector<1x3x256xf32> to vector<3x256xf32>
    %c21_64 = arith.constant 21 : index
    %c256_65 = arith.constant 256 : index
    %49 = vector.load %arg4[%c21_64, %c256_65] : memref<32x512xf32, #tpu.memory_space<vmem>>, vector<3x256xf32>
    tpu.vector_store %arg4[%c21_64, %c256_65], %48 {strides = array<i32>} : memref<32x512xf32, #tpu.memory_space<vmem>>, vector<3x256xf32>,
    %c0_66 = arith.constant 0 : index
    %c0_67 = arith.constant 0 : index
    %c34 = arith.constant 34 : index
    %50 = vector.load %arg0[%c0_66, %c0_67, %c34] : memref<2x3x384xf32, #tpu.memory_space<vmem>>, vector<1x3x256xf32>
    %51 = vector.shape_cast %50 : vector<1x3x256xf32> to vector<3x256xf32>
    %c24 = arith.constant 24 : index
    %c0_68 = arith.constant 0 : index
    %52 = vector.load %arg4[%c24, %c0_68] : memref<32x512xf32, #tpu.memory_space<vmem>>, vector<3x256xf32>
    tpu.vector_store %arg4[%c24, %c0_68], %51 {strides = array<i32>} : memref<32x512xf32, #tpu.memory_space<vmem>>, vector<3x256xf32>,
    %c1_69 = arith.constant 1 : index
    %c0_70 = arith.constant 0 : index
    %c34_71 = arith.constant 34 : index
    %53 = vector.load %arg0[%c1_69, %c0_70, %c34_71] : memref<2x3x384xf32, #tpu.memory_space<vmem>>, vector<1x3x256xf32>
    %54 = vector.shape_cast %53 : vector<1x3x256xf32> to vector<3x256xf32>
    %c24_72 = arith.constant 24 : index
    %c256_73 = arith.constant 256 : index
    %55 = vector.load %arg4[%c24_72, %c256_73] : memref<32x512xf32, #tpu.memory_space<vmem>>, vector<3x256xf32>
    tpu.vector_store %arg4[%c24_72, %c256_73], %54 {strides = array<i32>} : memref<32x512xf32, #tpu.memory_space<vmem>>, vector<3x256xf32>,
    %c0_74 = arith.constant 0 : index
    %c0_75 = arith.constant 0 : index
    %56 = vector.load %arg1[%c0_74, %c0_75] : memref<6x32xf32, #tpu.memory_space<vmem>>, vector<6x32xf32>
    %c0_76 = arith.constant 0 : index
    %c0_77 = arith.constant 0 : index
    %57 = vector.load %arg4[%c0_76, %c0_77] : memref<32x512xf32, #tpu.memory_space<vmem>>, vector<32x512xf32>
    %cst_78 = arith.constant dense<0.000000e+00> : vector<6x512xf32>
    %58 = tpu.matmul %56, %57, %cst_78 {dimension_numbers = #tpu.dot_dimension_numbers<[1], [0], [0], [1], [0, 0, 1, 1], [], []>} : vector<6x32xf32>, vector<32x512xf32>, vector<6x512xf32> -> vector<6x512xf32>
    %c0_79 = arith.constant 0 : index
    %c0_80 = arith.constant 0 : index
    %59 = vector.load %arg2[%c0_79, %c0_80] : memref<6x1xf32, #tpu.memory_space<vmem>>, vector<6x1xf32>
    %60 = vector.broadcast %59 : vector<6x1xf32> to vector<6x512xf32>
    %61 = arith.addf %58, %60 : vector<6x512xf32>
    %62 = vector.extract_strided_slice %61 {offsets = [0, 0], sizes = [6, 256], strides = [1, 1]} : vector<6x512xf32> to vector<6x256xf32>
    %c0_81 = arith.constant 0 : index
    %c0_82 = arith.constant 0 : index
    %c0_83 = arith.constant 0 : index
    %63 = vector.load %arg3[%c0_81, %c0_82, %c0_83] : memref<2x6x256xf32, #tpu.memory_space<vmem>>, vector<1x6x256xf32>
    %64 = vector.shape_cast %63 : vector<1x6x256xf32> to vector<6x256xf32>
    %65 = vector.shape_cast %62 : vector<6x256xf32> to vector<1x6x256xf32>
    tpu.vector_store %arg3[%c0_81, %c0_82, %c0_83], %65 {strides = array<i32>} : memref<2x6x256xf32, #tpu.memory_space<vmem>>, vector<1x6x256xf32>,
    %66 = vector.extract_strided_slice %61 {offsets = [0, 256], sizes = [6, 256], strides = [1, 1]} : vector<6x512xf32> to vector<6x256xf32>
    %c1_84 = arith.constant 1 : index
    %c0_85 = arith.constant 0 : index
    %c0_86 = arith.constant 0 : index
    %67 = vector.load %arg3[%c1_84, %c0_85, %c0_86] : memref<2x6x256xf32, #tpu.memory_space<vmem>>, vector<1x6x256xf32>
    %68 = vector.shape_cast %67 : vector<1x6x256xf32> to vector<6x256xf32>
    %69 = vector.shape_cast %66 : vector<6x256xf32> to vector<1x6x256xf32>
    tpu.vector_store %arg3[%c1_84, %c0_85, %c0_86], %69 {strides = array<i32>} : memref<2x6x256xf32, #tpu.memory_space<vmem>>, vector<1x6x256xf32>,
    return
  }
}

</mosaic_0001>

<llo_original>
// kernel: tpu_custom_call.1
$region0: #{tpu_custom_call.1}
  #allocation0 [shape = 'u32[]', space=smem, size = 0x4, offset = 0x4, fixed_abs, tag = 'smem constant byte address 0x4 - core index']
  #allocation1 [shape = 'u32[144,128]{1,0:T(1,128)}', space=vmem, size = 0x12000, scoped, tag = 'internal scratch']
  #allocation2 [shape = 'f32[32,512]{1,0:T(8,128)}', space=vmem, size = 0x10000, scoped, tag = 'scratch operand']
  %s0 = inlined_call_operand.vmem [shape: f32[2,3,384], index: 0, kind: input, shape index: {}]
  %s1 = inlined_call_operand.vmem [shape: f32[6,32], index: 1, kind: input, shape index: {}]
  %s2 = inlined_call_operand.vmem [shape: f32[6,1], index: 2, kind: input, shape index: {}]
  %s3 = inlined_call_operand.vmem [shape: f32[2,6,256], index: 3, kind: output, shape index: {}]
  %s4 = sld [smem:[#allocation0]]
  $region22: #{tpu_custom_call.1} parent=0
    _
  %s6 = ssub.s32 1, %s4
  %s7 = scalar_select 0, %s6, %s4
  // Predicated region
  $region2: #{tpu_custom_call.1} parent=0 // pred_check
    _
  $region3: #{tpu_custom_call.1} parent=0 // pred_check_branch
    %9 = sbr.rel (0) target = $region5
  $region4: #{tpu_custom_call.1} parent=0 // pred_region
    _
  $region5: #{tpu_custom_call.1} parent=0 // pred_fallthru
    _
  // Predicated region
  $region6: #{tpu_custom_call.1} parent=0 // pred_check
    _
  $region7: #{tpu_custom_call.1} parent=0 // pred_check_branch
    %11 = sbr.rel (0) target = $region9
  $region8: #{tpu_custom_call.1} parent=0 // pred_region
    _
  $region9: #{tpu_custom_call.1} parent=0 // pred_fallthru
    _
  // Predicated region
  $region10: #{tpu_custom_call.1} parent=0 // pred_check
    _
  $region11: #{tpu_custom_call.1} parent=0 // pred_check_branch
    %13 = sbr.rel (0) target = $region13
  $region12: #{tpu_custom_call.1} parent=0 // pred_region
    _
  $region13: #{tpu_custom_call.1} parent=0 // pred_fallthru
    _
  %14 = vst [vmem:[#allocation2 + $0x60] sm:$0xf8] 0.0
  %15 = vst [vmem:[#allocation2 + $0x68] sm:$0xf8] 0.0
  %16 = vst [vmem:[#allocation2 + $0x70] sm:$0xf8] 0.0
  %17 = vst [vmem:[#allocation2 + $0x78] sm:$0xf8] 0.0
  %v18 = vld [vmem:[%s0] sm:$0x77]
  %v20 = vcombine.high %v18, %v18
  %22 = vst [vmem:[#allocation2] sm:$0x7] %v18
  %23 = vst [vmem:[#allocation2 + $0x8] sm:$0x7] %v20
  %s24 = scalar_lea.vmem %s0, 12
  %v25 = vld [vmem:[%s24] sm:$0x77]
  %v27 = vcombine.high %v25, %v25
  %29 = vst [vmem:[#allocation2 + $0x10] sm:$0x7] %v25
  %30 = vst [vmem:[#allocation2 + $0x18] sm:$0x7] %v27
  %v31 = vld [vmem:[%s0] sm:$0x77]
  %v32 = vld [vmem:[%s0 + $0x8] sm:$0x7]
  %v35 = vcombine.high %v31, %v31
  %v36 = vrot.slane %v31, 5
  %v37 = vrot.slane %v35, 5
  %v38 = vrot.slane %v32, 5
  %39 = vrot.lane.b32.xlu0 %v36, 127
  %v40 = vpop.permute.xlu0 %39
  %41 = vrot.lane.b32.xlu0 %v37, 127
  %v42 = vpop.permute.xlu0 %41
  %43 = vrot.lane.b32.xlu0 %v38, 127
  %v44 = vpop.permute.xlu0 %43
  %vm45 = vcmask 1039360
  %v46 = vsel %vm45, %v40, %v42
  %v47 = vsel %vm45, %v42, %v44
  %50 = vst [vmem:[#allocation2] sm:$0x38] %v46
  %51 = vst [vmem:[#allocation2 + $0x8] sm:$0x38] %v47
  %v52 = vld [vmem:[%s24] sm:$0x77]
  %v53 = vld [vmem:[%s24 + $0x8] sm:$0x7]
  %v56 = vcombine.high %v52, %v52
  %v57 = vrot.slane %v52, 5
  %v58 = vrot.slane %v56, 5
  %v59 = vrot.slane %v53, 5
  %60 = vrot.lane.b32.xlu0 %v57, 127
  %v61 = vpop.permute.xlu0 %60
  %62 = vrot.lane.b32.xlu0 %v58, 127
  %v63 = vpop.permute.xlu0 %62
  %64 = vrot.lane.b32.xlu0 %v59, 127
  %v65 = vpop.permute.xlu0 %64
  %v66 = vsel %vm45, %v61, %v63
  %v67 = vsel %vm45, %v63, %v65
  %70 = vst [vmem:[#allocation2 + $0x10] sm:$0x38] %v66
  %71 = vst [vmem:[#allocation2 + $0x18] sm:$0x38] %v67
  %v72 = vld [vmem:[%s0] sm:$0x77]
  %v73 = vld [vmem:[%s0 + $0x8] sm:$0x7]
  %v76 = vcombine.high %v72, %v72
  %v77 = vrot.slane %v72, 2
  %v78 = vrot.slane %v76, 2
  %v79 = vrot.slane %v73, 2
  %80 = vrot.lane.b32.xlu0 %v77, 126
  %v81 = vpop.permute.xlu0 %80
  %82 = vrot.lane.b32.xlu0 %v78, 126
  %v83 = vpop.permute.xlu0 %82
  %84 = vrot.lane.b32.xlu0 %v79, 126
  %v85 = vpop.permute.xlu0 %84
  %vm86 = vcmask 1031168
  %v87 = vsel %vm86, %v81, %v83
  %v88 = vsel %vm86, %v83, %v85
  %91 = vst [vmem:[#allocation2] sm:$0xc0] %v87
  %92 = vst [vmem:[#allocation2 + $0x8] sm:$0xc0] %v88
  %93 = vst [vmem:[#allocation2 + $0x20] sm:$0x1] %v87
  %94 = vst [vmem:[#allocation2 + $0x28] sm:$0x1] %v88
  %v95 = vld [vmem:[%s24] sm:$0x77]
  %v96 = vld [vmem:[%s24 + $0x8] sm:$0x7]
  %v99 = vcombine.high %v95, %v95
  %v100 = vrot.slane %v95, 2
  %v101 = vrot.slane %v99, 2
  %v102 = vrot.slane %v96, 2
  %103 = vrot.lane.b32.xlu0 %v100, 126
  %v104 = vpop.permute.xlu0 %103
  %105 = vrot.lane.b32.xlu0 %v101, 126
  %v106 = vpop.permute.xlu0 %105
  %107 = vrot.lane.b32.xlu0 %v102, 126
  %v108 = vpop.permute.xlu0 %107
  %v109 = vsel %vm86, %v104, %v106
  %v110 = vsel %vm86, %v106, %v108
  %113 = vst [vmem:[#allocation2 + $0x10] sm:$0xc0] %v109
  %114 = vst [vmem:[#allocation2 + $0x18] sm:$0xc0] %v110
  %115 = vst [vmem:[#allocation2 + $0x30] sm:$0x1] %v109
  %116 = vst [vmem:[#allocation2 + $0x38] sm:$0x1] %v110
  %v117 = vld [vmem:[%s0] sm:$0x77]
  %v118 = vld [vmem:[%s0 + $0x8] sm:$0x7]
  %v121 = vcombine.high %v117, %v117
  %v122 = vrot.slane %v117, 7
  %v123 = vrot.slane %v121, 7
  %v124 = vrot.slane %v118, 7
  %125 = vrot.lane.b32.xlu0 %v122, 112
  %v126 = vpop.permute.xlu0 %125
  %127 = vrot.lane.b32.xlu0 %v123, 112
  %v128 = vpop.permute.xlu0 %127
  %129 = vrot.lane.b32.xlu0 %v124, 112
  %v130 = vpop.permute.xlu0 %129
  %vm131 = vcmask 916480
  %v132 = vsel %vm131, %v126, %v128
  %v133 = vsel %vm131, %v128, %v130
  %136 = vst [vmem:[#allocation2 + $0x20] sm:$0xe] %v132
  %137 = vst [vmem:[#allocation2 + $0x28] sm:$0xe] %v133
  %v138 = vld [vmem:[%s24] sm:$0x77]
  %v139 = vld [vmem:[%s24 + $0x8] sm:$0x7]
  %v142 = vcombine.high %v138, %v138
  %v143 = vrot.slane %v138, 7
  %v144 = vrot.slane %v142, 7
  %v145 = vrot.slane %v139, 7
  %146 = vrot.lane.b32.xlu0 %v143, 112
  %v147 = vpop.permute.xlu0 %146
  %148 = vrot.lane.b32.xlu0 %v144, 112
  %v149 = vpop.permute.xlu0 %148
  %150 = vrot.lane.b32.xlu0 %v145, 112
  %v151 = vpop.permute.xlu0 %150
  %v152 = vsel %vm131, %v147, %v149
  %v153 = vsel %vm131, %v149, %v151
  %156 = vst [vmem:[#allocation2 + $0x30] sm:$0xe] %v152
  %157 = vst [vmem:[#allocation2 + $0x38] sm:$0xe] %v153
  %v158 = vld [vmem:[%s0] sm:$0x77]
  %v159 = vld [vmem:[%s0 + $0x8] sm:$0x7]
  %v162 = vcombine.low %v158, %v158
  %v163 = vcombine.low %v159, %v159
  %164 = vrot.lane.b32.xlu0 %v162, 111
  %v165 = vpop.permute.xlu0 %164
  %166 = vrot.lane.b32.xlu0 %v158, 111
  %v167 = vpop.permute.xlu0 %166
  %168 = vrot.lane.b32.xlu0 %v163, 111
  %v169 = vpop.permute.xlu0 %168
  %vm170 = vcmask 908288
  %v171 = vsel %vm170, %v165, %v167
  %v172 = vsel %vm170, %v167, %v169
  %175 = vst [vmem:[#allocation2 + $0x20] sm:$0x70] %v171
  %176 = vst [vmem:[#allocation2 + $0x28] sm:$0x70] %v172
  %v177 = vld [vmem:[%s24] sm:$0x77]
  %v178 = vld [vmem:[%s24 + $0x8] sm:$0x7]
  %v181 = vcombine.low %v177, %v177
  %v182 = vcombine.low %v178, %v178
  %183 = vrot.lane.b32.xlu0 %v181, 111
  %v184 = vpop.permute.xlu0 %183
  %185 = vrot.lane.b32.xlu0 %v177, 111
  %v186 = vpop.permute.xlu0 %185
  %187 = vrot.lane.b32.xlu0 %v182, 111
  %v188 = vpop.permute.xlu0 %187
  %v189 = vsel %vm170, %v184, %v186
  %v190 = vsel %vm170, %v186, %v188
  %193 = vst [vmem:[#allocation2 + $0x30] sm:$0x70] %v189
  %194 = vst [vmem:[#allocation2 + $0x38] sm:$0x70] %v190
  %v195 = vld [vmem:[%s0] sm:$0x77]
  %v196 = vld [vmem:[%s0 + $0x8] sm:$0x7]
  %v199 = vcombine.high %v195, %v195
  %v200 = vrot.slane %v195, 1
  %v201 = vrot.slane %v199, 1
  %v202 = vrot.slane %v196, 1
  %203 = vrot.lane.b32.xlu0 %v200, 110
  %v204 = vpop.permute.xlu0 %203
  %205 = vrot.lane.b32.xlu0 %v201, 110
  %v206 = vpop.permute.xlu0 %205
  %207 = vrot.lane.b32.xlu0 %v202, 110
  %v208 = vpop.permute.xlu0 %207
  %vm209 = vcmask 900096
  %v210 = vsel %vm209, %v204, %v206
  %v211 = vsel %vm209, %v206, %v208
  %214 = vst [vmem:[#allocation2 + $0x20] sm:$0x80] %v210
  %215 = vst [vmem:[#allocation2 + $0x28] sm:$0x80] %v211
  %216 = vst [vmem:[#allocation2 + $0x40] sm:$0x3] %v210
  %217 = vst [vmem:[#allocation2 + $0x48] sm:$0x3] %v211
  %v218 = vld [vmem:[%s24] sm:$0x77]
  %v219 = vld [vmem:[%s24 + $0x8] sm:$0x7]
  %v222 = vcombine.high %v218, %v218
  %v223 = vrot.slane %v218, 1
  %v224 = vrot.slane %v222, 1
  %v225 = vrot.slane %v219, 1
  %226 = vrot.lane.b32.xlu0 %v223, 110
  %v227 = vpop.permute.xlu0 %226
  %228 = vrot.lane.b32.xlu0 %v224, 110
  %v229 = vpop.permute.xlu0 %228
  %230 = vrot.lane.b32.xlu0 %v225, 110
  %v231 = vpop.permute.xlu0 %230
  %v232 = vsel %vm209, %v227, %v229
  %v233 = vsel %vm209, %v229, %v231
  %236 = vst [vmem:[#allocation2 + $0x30] sm:$0x80] %v232
  %237 = vst [vmem:[#allocation2 + $0x38] sm:$0x80] %v233
  %238 = vst [vmem:[#allocation2 + $0x50] sm:$0x3] %v232
  %239 = vst [vmem:[#allocation2 + $0x58] sm:$0x3] %v233
  %v240 = vld [vmem:[%s0] sm:$0x77]
  %v241 = vld [vmem:[%s0 + $0x8] sm:$0x7]
  %v244 = vcombine.high %v240, %v240
  %v245 = vrot.slane %v240, 6
  %v246 = vrot.slane %v244, 6
  %v247 = vrot.slane %v241, 6
  %248 = vrot.lane.b32.xlu0 %v245, 96
  %v249 = vpop.permute.xlu0 %248
  %250 = vrot.lane.b32.xlu0 %v246, 96
  %v251 = vpop.permute.xlu0 %250
  %252 = vrot.lane.b32.xlu0 %v247, 96
  %v253 = vpop.permute.xlu0 %252
  %vm254 = vcmask 785408
  %v255 = vsel %vm254, %v249, %v251
  %v256 = vsel %vm254, %v251, %v253
  %259 = vst [vmem:[#allocation2 + $0x40] sm:$0x1c] %v255
  %260 = vst [vmem:[#allocation2 + $0x48] sm:$0x1c] %v256
  %v261 = vld [vmem:[%s24] sm:$0x77]
  %v262 = vld [vmem:[%s24 + $0x8] sm:$0x7]
  %v265 = vcombine.high %v261, %v261
  %v266 = vrot.slane %v261, 6
  %v267 = vrot.slane %v265, 6
  %v268 = vrot.slane %v262, 6
  %269 = vrot.lane.b32.xlu0 %v266, 96
  %v270 = vpop.permute.xlu0 %269
  %271 = vrot.lane.b32.xlu0 %v267, 96
  %v272 = vpop.permute.xlu0 %271
  %273 = vrot.lane.b32.xlu0 %v268, 96
  %v274 = vpop.permute.xlu0 %273
  %v275 = vsel %vm254, %v270, %v272
  %v276 = vsel %vm254, %v272, %v274
  %279 = vst [vmem:[#allocation2 + $0x50] sm:$0x1c] %v275
  %280 = vst [vmem:[#allocation2 + $0x58] sm:$0x1c] %v276
  %v281 = vld [vmem:[%s0] sm:$0x77]
  %v282 = vld [vmem:[%s0 + $0x8] sm:$0x7]
  %v285 = vcombine.high %v281, %v281
  %v286 = vrot.slane %v281, 3
  %v287 = vrot.slane %v285, 3
  %v288 = vrot.slane %v282, 3
  %289 = vrot.lane.b32.xlu0 %v286, 95
  %v290 = vpop.permute.xlu0 %289
  %291 = vrot.lane.b32.xlu0 %v287, 95
  %v292 = vpop.permute.xlu0 %291
  %293 = vrot.lane.b32.xlu0 %v288, 95
  %v294 = vpop.permute.xlu0 %293
  %vm295 = vcmask 777216
  %v296 = vsel %vm295, %v290, %v292
  %v297 = vsel %vm295, %v292, %v294
  %300 = vst [vmem:[#allocation2 + $0x40] sm:$0xe0] %v296
  %301 = vst [vmem:[#allocation2 + $0x48] sm:$0xe0] %v297
  %v302 = vld [vmem:[%s24] sm:$0x77]
  %v303 = vld [vmem:[%s24 + $0x8] sm:$0x7]
  %v306 = vcombine.high %v302, %v302
  %v307 = vrot.slane %v302, 3
  %v308 = vrot.slane %v306, 3
  %v309 = vrot.slane %v303, 3
  %310 = vrot.lane.b32.xlu0 %v307, 95
  %v311 = vpop.permute.xlu0 %310
  %312 = vrot.lane.b32.xlu0 %v308, 95
  %v313 = vpop.permute.xlu0 %312
  %314 = vrot.lane.b32.xlu0 %v309, 95
  %v315 = vpop.permute.xlu0 %314
  %v316 = vsel %vm295, %v311, %v313
  %v317 = vsel %vm295, %v313, %v315
  %320 = vst [vmem:[#allocation2 + $0x50] sm:$0xe0] %v316
  %321 = vst [vmem:[#allocation2 + $0x58] sm:$0xe0] %v317
  %v322 = vld [vmem:[%s0] sm:$0x77]
  %v323 = vld [vmem:[%s0 + $0x8] sm:$0x7]
  %v326 = vcombine.high %v322, %v322
  %327 = vrot.lane.b32.xlu0 %v322, 94
  %v328 = vpop.permute.xlu0 %327
  %329 = vrot.lane.b32.xlu0 %v326, 94
  %v330 = vpop.permute.xlu0 %329
  %331 = vrot.lane.b32.xlu0 %v323, 94
  %v332 = vpop.permute.xlu0 %331
  %vm333 = vcmask 769024
  %v334 = vsel %vm333, %v328, %v330
  %v335 = vsel %vm333, %v330, %v332
  %338 = vst [vmem:[#allocation2 + $0x60] sm:$0x7] %v334
  %339 = vst [vmem:[#allocation2 + $0x68] sm:$0x7] %v335
  %v340 = vld [vmem:[%s24] sm:$0x77]
  %v341 = vld [vmem:[%s24 + $0x8] sm:$0x7]
  %v344 = vcombine.high %v340, %v340
  %345 = vrot.lane.b32.xlu0 %v340, 94
  %v346 = vpop.permute.xlu0 %345
  %347 = vrot.lane.b32.xlu0 %v344, 94
  %v348 = vpop.permute.xlu0 %347
  %349 = vrot.lane.b32.xlu0 %v341, 94
  %v350 = vpop.permute.xlu0 %349
  %v351 = vsel %vm333, %v346, %v348
  %v352 = vsel %vm333, %v348, %v350
  %355 = vst [vmem:[#allocation2 + $0x70] sm:$0x7] %v351
  %356 = vst [vmem:[#allocation2 + $0x78] sm:$0x7] %v352
  %v357 = vld [vmem:[%s1] sm:$0x3f]
  %v358 = vld [vmem:[#allocation2] sm:$0xff]
  %v359 = vld [vmem:[#allocation2 + $0x8] sm:$0xff]
  %v360 = vld [vmem:[#allocation2 + $0x10] sm:$0xff]
  %v361 = vld [vmem:[#allocation2 + $0x18] sm:$0xff]
  %v362 = vld [vmem:[#allocation2 + $0x20] sm:$0xff]
  %v363 = vld [vmem:[#allocation2 + $0x28] sm:$0xff]
  %v364 = vld [vmem:[#allocation2 + $0x30] sm:$0xff]
  %v365 = vld [vmem:[#allocation2 + $0x38] sm:$0xff]
  %v366 = vld [vmem:[#allocation2 + $0x40] sm:$0xff]
  %v367 = vld [vmem:[#allocation2 + $0x48] sm:$0xff]
  %v368 = vld [vmem:[#allocation2 + $0x50] sm:$0xff]
  %v369 = vld [vmem:[#allocation2 + $0x58] sm:$0xff]
  %v370 = vld [vmem:[#allocation2 + $0x60] sm:$0xff]
  %v371 = vld [vmem:[#allocation2 + $0x68] sm:$0xff]
  %v372 = vld [vmem:[#allocation2 + $0x70] sm:$0xff]
  %v373 = vld [vmem:[#allocation2 + $0x78] sm:$0xff]
  %v374 = vld [vmem:[%s2] sm:$0x3f]
  %376 = vset.pattern.permute.xlu0 0
  %377 = vperm.xlu0 %376, %v374
  %v378 = vpop.permute.xlu0 %377
  %vm380 = vcmask 261120
  %v382 = vsel %vm380, %v357, 0
  %384 = vmatprep.subr.mxu0 %v359
  %385 = vmatpush1.msra.mxu0 %v358
  %386 = vmatprep.subr.mxu0 %v363
  %387 = vmatpush1.msra.mxu0 %v362
  %388 = vmatprep.subr.mxu0 %v367
  %389 = vmatpush1.msra.mxu0 %v366
  %390 = vmatprep.subr.mxu0 %v371
  %391 = vmatpush1.msra.mxu0 %v370
  %392 = vmatprep.subr.mxu0 0.0
  %393 = vmatpush1.msra.mxu0 0.0
  %394 = vmatprep.subr.mxu0 0.0
  %395 = vmatpush1.msra.mxu0 0.0
  %396 = vmatprep.subr.mxu0 0.0
  %397 = vmatpush1.msra.mxu0 0.0
  %398 = vmatprep.subr.mxu0 0.0
  %399 = vmatpush1.msra.mxu0 0.0
  %400 = vmatprep.subr.mxu0 0.0
  %401 = vmatpush1.msra.mxu0 0.0
  %402 = vmatprep.subr.mxu0 0.0
  %403 = vmatpush1.msra.mxu0 0.0
  %404 = vmatprep.subr.mxu0 0.0
  %405 = vmatpush1.msra.mxu0 0.0
  %406 = vmatprep.subr.mxu0 0.0
  %407 = vmatpush1.msra.mxu0 0.0
  %408 = vmatprep.subr.mxu0 0.0
  %409 = vmatpush1.msra.mxu0 0.0
  %410 = vmatprep.subr.mxu0 0.0
  %411 = vmatpush1.msra.mxu0 0.0
  %412 = vmatprep.subr.mxu0 0.0
  %413 = vmatpush1.msra.mxu0 0.0
  %414 = vmatprep.subr.mxu0 0.0
  %415 = vmatpush1.msra.mxu0 0.0
  %416 = vmatprep.subr.mxu0 0.0
  %417 = vmatpush1.msra.mxu0 0.0
  %418 = vmatprep.subr.mxu0 0.0
  %419 = vmatpush1.msra.mxu0 0.0
  %420 = vmatprep.subr.mxu0 0.0
  %421 = vmatpush1.msra.mxu0 0.0
  %422 = vmatprep.subr.mxu0 0.0
  %423 = vmatpush1.msra.mxu0 0.0
  %424 = vmatprep.subr.mxu0 0.0
  %425 = vmatpush1.msra.mxu0 0.0
  %426 = vmatprep.subr.mxu0 0.0
  %427 = vmatpush1.msra.mxu0 0.0
  %428 = vmatprep.subr.mxu0 0.0
  %429 = vmatpush1.msra.mxu0 0.0
  %430 = vmatprep.subr.mxu0 0.0
  %431 = vmatpush1.msra.mxu0 0.0
  %432 = vmatprep.subr.mxu0 0.0
  %433 = vmatpush1.msra.mxu0 0.0
  %434 = vmatprep.subr.mxu0 0.0
  %435 = vmatpush1.msra.mxu0 0.0
  %436 = vmatprep.subr.mxu0 0.0
  %437 = vmatpush1.msra.mxu0 0.0
  %438 = vmatprep.subr.mxu0 0.0
  %439 = vmatpush1.msra.mxu0 0.0
  %440 = vmatprep.subr.mxu0 0.0
  %441 = vmatpush1.msra.mxu0 0.0
  %442 = vmatprep.subr.mxu0 0.0
  %443 = vmatpush1.msra.mxu0 0.0
  %444 = vmatprep.subr.mxu0 0.0
  %445 = vmatpush1.msra.mxu0 0.0
  %446 = vmatprep.subr.mxu0 0.0
  %447 = vmatpush1.msra.mxu0 0.0
  %448 = vmatprep.mubr.f32.mxu0 0.0
  %449 = vmatmul.mubr.f32.gmra.mrb[0].mxu0 %v382
  %v450 = vpop.f32.mrb[0].mxu0
  %v451 = vadd.f32 %v378, %v450
  %v452 = vpop.f32.mrb[0].mxu0
  %v453 = vadd.f32 %v378, %v452
  %454 = vdwg.mxu0
  %455 = vmatprep.subr.mxu0 %v361
  %456 = vmatpush1.msra.mxu0 %v360
  %457 = vmatprep.subr.mxu0 %v365
  %458 = vmatpush1.msra.mxu0 %v364
  %459 = vmatprep.subr.mxu0 %v369
  %460 = vmatpush1.msra.mxu0 %v368
  %461 = vmatprep.subr.mxu0 %v373
  %462 = vmatpush1.msra.mxu0 %v372
  %463 = vmatprep.subr.mxu0 0.0
  %464 = vmatpush1.msra.mxu0 0.0
  %465 = vmatprep.subr.mxu0 0.0
  %466 = vmatpush1.msra.mxu0 0.0
  %467 = vmatprep.subr.mxu0 0.0
  %468 = vmatpush1.msra.mxu0 0.0
  %469 = vmatprep.subr.mxu0 0.0
  %470 = vmatpush1.msra.mxu0 0.0
  %471 = vmatprep.subr.mxu0 0.0
  %472 = vmatpush1.msra.mxu0 0.0
  %473 = vmatprep.subr.mxu0 0.0
  %474 = vmatpush1.msra.mxu0 0.0
  %475 = vmatprep.subr.mxu0 0.0
  %476 = vmatpush1.msra.mxu0 0.0
  %477 = vmatprep.subr.mxu0 0.0
  %478 = vmatpush1.msra.mxu0 0.0
  %479 = vmatprep.subr.mxu0 0.0
  %480 = vmatpush1.msra.mxu0 0.0
  %481 = vmatprep.subr.mxu0 0.0
  %482 = vmatpush1.msra.mxu0 0.0
  %483 = vmatprep.subr.mxu0 0.0
  %484 = vmatpush1.msra.mxu0 0.0
  %485 = vmatprep.subr.mxu0 0.0
  %486 = vmatpush1.msra.mxu0 0.0
  %487 = vmatprep.subr.mxu0 0.0
  %488 = vmatpush1.msra.mxu0 0.0
  %489 = vmatprep.subr.mxu0 0.0
  %490 = vmatpush1.msra.mxu0 0.0
  %491 = vmatprep.subr.mxu0 0.0
  %492 = vmatpush1.msra.mxu0 0.0
  %493 = vmatprep.subr.mxu0 0.0
  %494 = vmatpush1.msra.mxu0 0.0
  %495 = vmatprep.subr.mxu0 0.0
  %496 = vmatpush1.msra.mxu0 0.0
  %497 = vmatprep.subr.mxu0 0.0
  %498 = vmatpush1.msra.mxu0 0.0
  %499 = vmatprep.subr.mxu0 0.0
  %500 = vmatpush1.msra.mxu0 0.0
  %501 = vmatprep.subr.mxu0 0.0
  %502 = vmatpush1.msra.mxu0 0.0
  %503 = vmatprep.subr.mxu0 0.0
  %504 = vmatpush1.msra.mxu0 0.0
  %505 = vmatprep.subr.mxu0 0.0
  %506 = vmatpush1.msra.mxu0 0.0
  %507 = vmatprep.subr.mxu0 0.0
  %508 = vmatpush1.msra.mxu0 0.0
  %509 = vmatprep.subr.mxu0 0.0
  %510 = vmatpush1.msra.mxu0 0.0
  %511 = vmatprep.subr.mxu0 0.0
  %512 = vmatpush1.msra.mxu0 0.0
  %513 = vmatprep.subr.mxu0 0.0
  %514 = vmatpush1.msra.mxu0 0.0
  %515 = vmatprep.subr.mxu0 0.0
  %516 = vmatpush1.msra.mxu0 0.0
  %517 = vmatprep.subr.mxu0 0.0
  %518 = vmatpush1.msra.mxu0 0.0
  %519 = vmatprep.mubr.f32.mxu0 0.0
  %520 = vmatmul.mubr.f32.gmra.mrb[0].mxu0 %v382
  %v521 = vpop.f32.mrb[0].mxu0
  %v522 = vadd.f32 %v378, %v521
  %v523 = vpop.f32.mrb[0].mxu0
  %v524 = vadd.f32 %v378, %v523
  %525 = vdwg.mxu0
  %526 = vst [vmem:[%s3] sm:$0x3f] %v451
  %527 = vst [vmem:[%s3 + $0x8] sm:$0x3f] %v453
  %s528 = scalar_lea.vmem %s3, 16
  %529 = vst [vmem:[%s528] sm:$0x3f] %v522
  %530 = vst [vmem:[%s528 + $0x8] sm:$0x3f] %v524
  // Predicated region
  $region14: #{tpu_custom_call.1} parent=0 // pred_check
    _
  $region15: #{tpu_custom_call.1} parent=0 // pred_check_branch
    %532 = sbr.rel (0) target = $region17
  $region16: #{tpu_custom_call.1} parent=0 // pred_region
    _
  $region17: #{tpu_custom_call.1} parent=0 // pred_fallthru
    _
  // Predicated region
  $region18: #{tpu_custom_call.1} parent=0 // pred_check
    _
  $region19: #{tpu_custom_call.1} parent=0 // pred_check_branch
    %534 = sbr.rel (0) target = $region21
  $region20: #{tpu_custom_call.1} parent=0 // pred_region
    _
  $region21: #{tpu_custom_call.1} parent=0 // pred_fallthru
    _

</llo_original>
